<compile_context>
chip_gen: v6e
topology: v6e:2x2x1
jax: 0.10.0
libtpu: 0.0.40
codegen_flags: <defaults>
</compile_context>

<pallas_src>
import numpy as np
import jax
import jax.numpy as jnp
from jax import lax
from jax.experimental import pallas as pl
from jax.experimental.pallas import tpu as pltpu


# --------------------------------------------------------------------------- #
# Kernel
# --------------------------------------------------------------------------- #
def _spa_kernel(x_ref, pool_ref, w1_ref, w2_ref, o_ref):
    # x_ref:    (BB, C, HWP)   batch block (channel-first, spatial flattened), any float dtype
    # pool_ref: (21, HWP)      f32 adaptive-avg-pool region masks (zeros in padded lanes)
    # w1_ref:   (HID, 21, C)   f32 fc[0] weights permuted to (hidden, region, channel)
    # w2_ref:   (C, HID)       f32 fc[2] weights (channel rows, hidden columns)
    x = x_ref[...].astype(jnp.float32)                   # upcast once; math stays f32
    bb, c, hw = x.shape
    n_regions = pool_ref.shape[0]                        # 21
    hid = w1_ref.shape[0]

    # --- all three adaptive average pools at once, on the MXU ---------------
    # pooled[b, r, ch] = sum_s pool[r, s] * x[b, ch, s]
    poolb = jnp.broadcast_to(pool_ref[...], (bb, n_regions, hw))
    pooled = jnp.einsum('brs,bcs->brc', poolb, x,
                        preferred_element_type=jnp.float32)     # (BB, 21, C)

    # --- fc1 (no bias) + ReLU + fc2 (no bias), accumulated per hidden unit ---
    # hidden[b, h]  = sum_{r, ch} pooled[b, r, ch] * W1[h, r, ch]
    # logits[b, ch] = sum_h relu(hidden[b, h]) * W2[ch, h]
    # HID = C // reduction is small here; the static unrolled loop keeps every
    # intermediate in a layout that needs no relayout (gate born (BB, C, 1)).
    logits = jnp.zeros((bb, c, 1), jnp.float32)
    for h in range(hid):
        prod = pooled * w1_ref[h]                        # (BB, 21, C)
        t = jnp.sum(prod, axis=2, keepdims=True)         # (BB, 21, 1)  lane reduce
        hidden_h = jnp.sum(t, axis=1, keepdims=True)     # (BB, 1, 1)   sublane reduce
        hidden_h = jnp.maximum(hidden_h, 0.0)            # ReLU
        logits = logits + hidden_h * w2_ref[:, h:h + 1]  # (C,1) bcast -> (BB, C, 1)

    gate = jax.nn.sigmoid(logits)                        # (BB, C, 1), f32 (EUP)

    # --- per-channel gating, broadcast over the spatial lanes ----------------
    # Re-read x from VMEM (cheap) so the f32 upcast above isn't held live.
    o_ref[...] = (x_ref[...].astype(jnp.float32) * gate).astype(o_ref.dtype)


# --------------------------------------------------------------------------- #
# Wrapper
# --------------------------------------------------------------------------- #
def _vmem_padded_bytes(shape, itemsize):
    """Bytes of one VMEM buffer of `shape`, with (8, 128) tile padding."""
    s = list(shape)
    s[-1] = max(((s[-1] + 127) // 128) * 128, 128)
    if len(s) >= 2:
        s[-2] = ((s[-2] + 7) // 8) * 8
    n = 1
    for d in s:
        n *= d
    return n * itemsize


def _choose_batch_block(b, per_item_bytes, budget_bytes):
    """Largest divisor of b whose double-buffered (in + out) footprint fits the
    budget, keeping >= 2 grid steps (both v7x TensorCores get work); prefer an
    even step count."""
    best, best_even = 1, None
    for cand in range(1, b + 1):
        if b % cand:
            continue
        steps = b // cand
        if b >= 2 and steps < 2:
            continue
        if 2 * 2 * cand * per_item_bytes > budget_bytes:   # 2 buffers x (in + out)
            continue
        best = cand
        if steps % 2 == 0:
            best_even = cand
    return best_even if best_even is not None else best


def spa_forward(x, pool_t, w1p, w2c, *, batch_block=None,
                vmem_limit_bytes=32 * 1024 * 1024):
    """x: (B, C, H, W) float32 or bfloat16.  pool_t: (21, H*W) f32 pool masks.
    w1p: (HID, 21, C) f32 fc1 weights.  w2c: (C, HID) f32 fc2 weights."""
    b, c, h, w = x.shape
    hw = h * w
    hwp = ((hw + 127) // 128) * 128              # lane-dense spatial dim
    n_regions = pool_t.shape[0]
    hid = w1p.shape[0]
    itemsize = jnp.dtype(x.dtype).itemsize

    x_flat = x.reshape(b, c, hw)
    if hwp != hw:
        x_flat = jnp.pad(x_flat, ((0, 0), (0, 0), (0, hwp - hw)))
    pool = jnp.asarray(pool_t, jnp.float32)
    if pool.shape[1] != hwp:
        pool = jnp.pad(pool, ((0, 0), (0, hwp - pool.shape[1])))

    # Resident (grid-invariant) VMEM: pool + fc1 + fc2 weights, double-buffered.
    resident = 2 * (_vmem_padded_bytes((n_regions, hwp), 4)
                    + _vmem_padded_bytes((hid, n_regions, c), 4)
                    + _vmem_padded_bytes((c, hid), 4))

    if batch_block is None:
        budget = max(int(0.75 * vmem_limit_bytes) - resident, 0)
        bb = _choose_batch_block(b, _vmem_padded_bytes((c, hwp), itemsize), budget)
    else:
        bb = max(1, min(batch_block, b))
        while b % bb:                            # pick a divisor of b
            bb -= 1

    cost = pl.CostEstimate(
        flops=int(2 * b * n_regions * c * hwp
                  + 2 * b * hid * n_regions * c + 2 * b * hid * c),
        transcendentals=int(b * c),
        bytes_accessed=int(2 * b * c * hwp * itemsize
                           + 4 * (n_regions * hwp + hid * n_regions * c + c * hid)),
    )

    out = pl.pallas_call(
        _spa_kernel,
        out_shape=jax.ShapeDtypeStruct((b, c, hwp), x.dtype),
        grid=(b // bb,),
        in_specs=[
            pl.BlockSpec((bb, c, hwp), lambda i: (i, 0, 0)),          # x batch block
            pl.BlockSpec((n_regions, hwp), lambda i: (0, 0)),         # pooling masks
            pl.BlockSpec((hid, n_regions, c), lambda i: (0, 0, 0)),   # fc1 weights
            pl.BlockSpec((c, hid), lambda i: (0, 0)),                 # fc2 weights
        ],
        out_specs=pl.BlockSpec((bb, c, hwp), lambda i: (i, 0, 0)),
        compiler_params=pltpu.CompilerParams(
            dimension_semantics=("parallel",),
            vmem_limit_bytes=vmem_limit_bytes),
        cost_estimate=cost,
    )(x_flat, pool, w1p.astype(jnp.float32), w2c.astype(jnp.float32))

    if hwp != hw:
        out = out[:, :, :hw]
    return out.reshape(b, c, h, w)


# --------------------------------------------------------------------------- #
# Host-side weight / mask preparation + pure-JAX reference
# --------------------------------------------------------------------------- #
def make_pool_matrix(h, w):
    """(21, H*W) matrix whose rows are adaptive-avg-pool region masks.

    Row order: [1x1] [2x2 row-major] [4x4 row-major] (matches torch's
    AdaptiveAvgPool2d outputs flattened in that order)."""
    rows = []
    for out in (1, 2, 4):
        for i in range(out):
            r0 = (i * h) // out
            r1 = -(-((i + 1) * h) // out)
            for j in range(out):
                c0 = (j * w) // out
                c1 = -(-((j + 1) * w) // out)
                m = np.zeros((h, w), np.float32)
                m[r0:r1, c0:c1] = 1.0 / float((r1 - r0) * (c1 - c0))
                rows.append(m.reshape(h * w))
    return np.stack(rows, axis=0)                       # (21, h*w)


def permute_fc1(w1, c):
    """Reorder torch Linear(channel*21 -> hid) weights to (hid, 21, C).

    torch concat order of the input vector:
      [pool1 (C)] [pool2 (C,4) row-major] [pool4 (C,16) row-major]."""
    hid = w1.shape[0]
    w_all = np.zeros((hid, 21, c), np.float32)
    w_all[:, 0, :] = w1[:, :c]
    w_all[:, 1:5, :] = w1[:, c:5 * c].reshape(hid, c, 4).transpose(0, 2, 1)
    w_all[:, 5:21, :] = w1[:, 5 * c:21 * c].reshape(hid, c, 16).transpose(0, 2, 1)
    return w_all


def spa_reference(x, w1, w2):
    """Pure-JAX mirror of the PyTorch forward (H, W divisible by 4)."""
    b, c, h, w = x.shape
    y1 = x.mean(axis=(2, 3)).reshape(b, -1)
    y2 = x.reshape(b, c, 2, h // 2, 2, w // 2).mean(axis=(3, 5)).reshape(b, -1)
    y3 = x.reshape(b, c, 4, h // 4, 4, w // 4).mean(axis=(3, 5)).reshape(b, -1)
    y = jnp.concatenate([y1, y2, y3], axis=1)
    hdn = jnp.maximum(y @ w1.T, 0.0)
    gate = jax.nn.sigmoid(hdn @ w2.T)
    return x * gate[:, :, None, None]


# --------------------------------------------------------------------------- #
# Driver
# --------------------------------------------------------------------------- #
if __name__ == "__main__":
    RED = 16                                # module default reduction

    for (B, C, H, W) in [(8, 32, 16, 16),   # HW = 256 (already lane-dense)
                         (4, 32, 12, 12)]:  # HW = 144 -> exercises the 128-pad path
        HID = C // RED
        key = jax.random.PRNGKey(0)
        kx, k1, k2 = jax.random.split(key, 3)
        x = jax.random.normal(kx, (B, C, H, W), dtype=jnp.float32)
        # Synthetic weights for nn.Linear(C*21, C//RED) / nn.Linear(C//RED, C), no bias.
        w1 = jax.random.normal(k1, (HID, C * 21), dtype=jnp.float32) / np.sqrt(C * 21)
        w2 = jax.random.normal(k2, (C, HID), dtype=jnp.float32) / np.sqrt(HID)

        pool_t = jnp.asarray(make_pool_matrix(H, W))           # (21, H*W)
        w1p = jnp.asarray(permute_fc1(np.asarray(w1), C))      # (HID, 21, C)
        w2c = w2                                               # (C, HID) already

        out = jax.block_until_ready(spa_forward(x, pool_t, w1p, w2c))
        ref = spa_reference(x, w1, w2)
        assert out.shape == (B, C, H, W)
        err = float(jnp.max(jnp.abs(out - ref)))
        assert jnp.allclose(out, ref, atol=1e-5, rtol=1e-5), f"max abs err = {err}"

    # bf16 I/O path (halves HBM traffic; in-kernel math stays f32).
    x_bf = x.astype(jnp.bfloat16)
    out_bf = jax.block_until_ready(spa_forward(x_bf, pool_t, w1p, w2c))
    ref_bf = spa_reference(x_bf.astype(jnp.float32), w1, w2)
    assert out_bf.dtype == jnp.bfloat16
    assert jnp.allclose(out_bf.astype(jnp.float32), ref_bf, atol=5e-2, rtol=5e-2)

    print("KERNEL_OK")
</pallas_src>

<mosaic_0001>
module attributes {stable_mosaic.version = 11 : i64} {
  func.func @_spa_kernel(%arg0: i32, %arg1: memref<4x32x256xf32, #tpu.memory_space<vmem>>, %arg2: memref<21x256xf32, #tpu.memory_space<vmem>>, %arg3: memref<2x21x32xf32, #tpu.memory_space<vmem>>, %arg4: memref<32x2xf32, #tpu.memory_space<vmem>>, %arg5: memref<4x32x256xf32, #tpu.memory_space<vmem>>) attributes {dimension_semantics = [#tpu.dimension_semantics<parallel>], iteration_bounds = array<i64: 2>, scalar_prefetch = 0 : i64, scratch_operands = 0 : i64, tpu.core_type = #tpu.core_type<tc>, window_params = [{transform_indices = @transform_0, window_bounds = array<i64: 4, 32, 256>}, {pipeline_mode = #tpu.pipeline_mode<synchronous>, transform_indices = @transform_1, window_bounds = array<i64: 21, 256>}, {pipeline_mode = #tpu.pipeline_mode<synchronous>, transform_indices = @transform_2, window_bounds = array<i64: 2, 21, 32>}, {pipeline_mode = #tpu.pipeline_mode<synchronous>, transform_indices = @transform_3, window_bounds = array<i64: 32, 2>}, {transform_indices = @transform_4, window_bounds = array<i64: 4, 32, 256>}]} {
    %c0 = arith.constant 0 : index
    %c0_0 = arith.constant 0 : index
    %c0_1 = arith.constant 0 : index
    %0 = vector.load %arg1[%c0, %c0_0, %c0_1] : memref<4x32x256xf32, #tpu.memory_space<vmem>>, vector<4x32x256xf32>
    %c0_2 = arith.constant 0 : index
    %c0_3 = arith.constant 0 : index
    %1 = vector.load %arg2[%c0_2, %c0_3] : memref<21x256xf32, #tpu.memory_space<vmem>>, vector<21x256xf32>
    %2 = vector.shape_cast %1 : vector<21x256xf32> to vector<1x21x256xf32>
    %3 = vector.broadcast %2 : vector<1x21x256xf32> to vector<4x21x256xf32>
    "tpu.trace_start"() <{level = 10 : i32, message = "brs,bcs->brc"}> : () -> ()
    %cst = arith.constant dense<0.000000e+00> : vector<4x21x32xf32>
    %4 = tpu.matmul %3, %0, %cst {dimension_numbers = #tpu.dot_dimension_numbers<[2], [2], [1], [1], [0, 0, 0, 1, 1, 1], [0], [0]>} : vector<4x21x256xf32>, vector<4x32x256xf32>, vector<4x21x32xf32> -> vector<4x21x32xf32>
    %cst_4 = arith.constant 0.000000e+00 : f32
    "tpu.trace_stop"() : () -> ()
    %5 = vector.broadcast %cst_4 : f32 to vector<4x32x1xf32>
    %c0_5 = arith.constant 0 : index
    %c0_6 = arith.constant 0 : index
    %c0_7 = arith.constant 0 : index
    %6 = vector.load %arg3[%c0_5, %c0_6, %c0_7] : memref<2x21x32xf32, #tpu.memory_space<vmem>>, vector<1x21x32xf32>
    %7 = vector.shape_cast %6 : vector<1x21x32xf32> to vector<21x32xf32>
    %8 = vector.shape_cast %7 : vector<21x32xf32> to vector<1x21x32xf32>
    %9 = vector.broadcast %8 : vector<1x21x32xf32> to vector<4x21x32xf32>
    %10 = arith.mulf %4, %9 : vector<4x21x32xf32>
    %cst_8 = arith.constant dense<0.000000e+00> : vector<4x21xf32>
    %11 = vector.multi_reduction <add>, %10, %cst_8 [2] : vector<4x21x32xf32> to vector<4x21xf32>
    %12 = vector.shape_cast %11 : vector<4x21xf32> to vector<4x21x1xf32>
    %cst_9 = arith.constant dense<0.000000e+00> : vector<4x1xf32>
    %13 = vector.multi_reduction <add>, %12, %cst_9 [1] : vector<4x21x1xf32> to vector<4x1xf32>
    %14 = vector.shape_cast %13 : vector<4x1xf32> to vector<4x1x1xf32>
    %cst_10 = arith.constant 0.000000e+00 : f32
    %15 = vector.broadcast %cst_10 : f32 to vector<4x1x1xf32>
    %16 = arith.maximumf %14, %15 : vector<4x1x1xf32>
    %c0_11 = arith.constant 0 : index
    %c0_12 = arith.constant 0 : index
    %17 = vector.load %arg4[%c0_11, %c0_12] : memref<32x2xf32, #tpu.memory_space<vmem>>, vector<32x1xf32>
    %18 = vector.shape_cast %17 : vector<32x1xf32> to vector<1x32x1xf32>
    %19 = vector.broadcast %16 : vector<4x1x1xf32> to vector<4x32x1xf32>
    %20 = vector.broadcast %18 : vector<1x32x1xf32> to vector<4x32x1xf32>
    %21 = arith.mulf %19, %20 : vector<4x32x1xf32>
    %22 = arith.addf %5, %21 : vector<4x32x1xf32>
    %c1 = arith.constant 1 : index
    %c0_13 = arith.constant 0 : index
    %c0_14 = arith.constant 0 : index
    %23 = vector.load %arg3[%c1, %c0_13, %c0_14] : memref<2x21x32xf32, #tpu.memory_space<vmem>>, vector<1x21x32xf32>
    %24 = vector.shape_cast %23 : vector<1x21x32xf32> to vector<21x32xf32>
    %25 = vector.shape_cast %24 : vector<21x32xf32> to vector<1x21x32xf32>
    %26 = vector.broadcast %25 : vector<1x21x32xf32> to vector<4x21x32xf32>
    %27 = arith.mulf %4, %26 : vector<4x21x32xf32>
    %cst_15 = arith.constant dense<0.000000e+00> : vector<4x21xf32>
    %28 = vector.multi_reduction <add>, %27, %cst_15 [2] : vector<4x21x32xf32> to vector<4x21xf32>
    %29 = vector.shape_cast %28 : vector<4x21xf32> to vector<4x21x1xf32>
    %cst_16 = arith.constant dense<0.000000e+00> : vector<4x1xf32>
    %30 = vector.multi_reduction <add>, %29, %cst_16 [1] : vector<4x21x1xf32> to vector<4x1xf32>
    %31 = vector.shape_cast %30 : vector<4x1xf32> to vector<4x1x1xf32>
    %cst_17 = arith.constant 0.000000e+00 : f32
    %32 = vector.broadcast %cst_17 : f32 to vector<4x1x1xf32>
    %33 = arith.maximumf %31, %32 : vector<4x1x1xf32>
    %c0_18 = arith.constant 0 : index
    %c1_19 = arith.constant 1 : index
    %34 = vector.load %arg4[%c0_18, %c1_19] : memref<32x2xf32, #tpu.memory_space<vmem>>, vector<32x1xf32>
    %35 = vector.shape_cast %34 : vector<32x1xf32> to vector<1x32x1xf32>
    %36 = vector.broadcast %33 : vector<4x1x1xf32> to vector<4x32x1xf32>
    %37 = vector.broadcast %35 : vector<1x32x1xf32> to vector<4x32x1xf32>
    %38 = arith.mulf %36, %37 : vector<4x32x1xf32>
    %39 = arith.addf %22, %38 : vector<4x32x1xf32>
    %40 = arith.negf %39 : vector<4x32x1xf32>
    %41 = math.exp %40 : vector<4x32x1xf32>
    %cst_20 = arith.constant 1.000000e+00 : f32
    %42 = vector.broadcast %cst_20 : f32 to vector<4x32x1xf32>
    %43 = arith.addf %42, %41 : vector<4x32x1xf32>
    %44 = arith.divf %42, %43 : vector<4x32x1xf32>
    %c0_21 = arith.constant 0 : index
    %c0_22 = arith.constant 0 : index
    %c0_23 = arith.constant 0 : index
    %45 = vector.load %arg1[%c0_21, %c0_22, %c0_23] : memref<4x32x256xf32, #tpu.memory_space<vmem>>, vector<4x32x256xf32>
    %46 = vector.broadcast %44 : vector<4x32x1xf32> to vector<4x32x256xf32>
    %47 = arith.mulf %45, %46 : vector<4x32x256xf32>
    %c0_24 = arith.constant 0 : index
    %c0_25 = arith.constant 0 : index
    %c0_26 = arith.constant 0 : index
    %48 = vector.load %arg5[%c0_24, %c0_25, %c0_26] : memref<4x32x256xf32, #tpu.memory_space<vmem>>, vector<4x32x256xf32>
    tpu.vector_store %arg5[%c0_24, %c0_25, %c0_26], %47 {strides = array<i32>} : memref<4x32x256xf32, #tpu.memory_space<vmem>>, vector<4x32x256xf32>,
    return
  }
  func.func @transform_0(%arg0: i32) -> (i32, i32, i32) {
    %c0_i32 = arith.constant 0 : i32
    %c0_i32_0 = arith.constant 0 : i32
    %c0_i32_1 = arith.constant 0 : i32
    return %arg0, %c0_i32, %c0_i32_0 : i32, i32, i32
  }
  func.func @transform_1(%arg0: i32) -> (i32, i32) {
    %c0_i32 = arith.constant 0 : i32
    %c0_i32_0 = arith.constant 0 : i32
    %c0_i32_1 = arith.constant 0 : i32
    return %c0_i32, %c0_i32_0 : i32, i32
  }
  func.func @transform_2(%arg0: i32) -> (i32, i32, i32) {
    %c0_i32 = arith.constant 0 : i32
    %c0_i32_0 = arith.constant 0 : i32
    %c0_i32_1 = arith.constant 0 : i32
    %c0_i32_2 = arith.constant 0 : i32
    return %c0_i32, %c0_i32_0, %c0_i32_1 : i32, i32, i32
  }
  func.func @transform_3(%arg0: i32) -> (i32, i32) {
    %c0_i32 = arith.constant 0 : i32
    %c0_i32_0 = arith.constant 0 : i32
    %c0_i32_1 = arith.constant 0 : i32
    return %c0_i32, %c0_i32_0 : i32, i32
  }
  func.func @transform_4(%arg0: i32) -> (i32, i32, i32) {
    %c0_i32 = arith.constant 0 : i32
    %c0_i32_0 = arith.constant 0 : i32
    %c0_i32_1 = arith.constant 0 : i32
    return %arg0, %c0_i32, %c0_i32_0 : i32, i32, i32
  }
}

</mosaic_0001>

<llo_original>
// kernel: tpu_custom_call.1
$region0: #{tpu_custom_call.1}
  #allocation0 [shape = 'u32[]', space=smem, size = 0x4, offset = 0x4, fixed_abs, tag = 'smem constant byte address 0x4 - core index']
  #allocation1 [shape = 'u32[144,128]{1,0:T(1,128)}', space=vmem, size = 0x12000, scoped, tag = 'internal scratch']
  %s0 = inlined_call_operand.hbm [shape: f32[8,32,256], index: 0, kind: input, shape index: {}]
  %s1 = inlined_call_operand.vmem [shape: f32[21,256], index: 1, kind: input, shape index: {}]
  %s2 = inlined_call_operand.vmem [shape: f32[2,21,32], index: 2, kind: input, shape index: {}]
  %s3 = inlined_call_operand.vmem [shape: f32[32,2], index: 3, kind: input, shape index: {}]
  %s4 = inlined_call_operand.hbm [shape: f32[8,32,256], index: 4, kind: output, shape index: {}]
  %s5 = sld [smem:[#allocation0]]
  $region53: #{tpu_custom_call.1} parent=0
    _
  %s7 = ssub.s32 1, %s5
  %s8 = scalar_select 0, %s7, %s5
  $region1: #{tpu_custom_call.1} parent=0
    #allocation2 [shape = 'u8[262144]{0}', space=vmem, size = 0x40000, scoped, tag = 'input window, operand 0']
    #allocation3 [shape = 's32[2]{0}', space=sflag, size = 0x8, scoped, tag = 'scoped memory for tpu_custom_call.1']
    #allocation4 [shape = 's32[2]{0}', space=sflag, size = 0x8, scoped, tag = 'scoped memory for tpu_custom_call.1']
    #allocation5 [shape = 'u8[262144]{0}', space=vmem, size = 0x40000, scoped, tag = 'output window, operand 0']
    %9 = vsyncpa [#allocation3], 0
    %s10 = scalar_lea.sflag [#allocation3], 1
    %11 = vsyncpa %s10, 0
    %12 = vsyncpa [#allocation4], 0
    %s13 = scalar_lea.sflag [#allocation4], 1
    %14 = vsyncpa %s13, 0
    loop: start=0, step=1, limit=4
    $region2: #{tpu_custom_call.1} parent=1 // loop_pre_header
      _
    $region3: #{tpu_custom_call.1} parent=1 // loop_header
      %s16 = sphi 0, %s20
      %p17 = scmp.ge.s32.totalorder %s16, 4
      %s26 = sphi 0, %s28
      %s29 = sphi 0, %s26
      %s30 = sphi 0, %s29
      %s46 = sphi 0, %s30
      %s50 = sphi 0, %s50
      %s52 = sphi 0, %s50
      %s53 = sphi 0, %s52
      %s67 = sphi 0, %s53
      %s71 = sphi 0, %s71
      %s73 = sphi 0, %s71
      %s74 = sphi 0, %s73
      %s88 = sphi 0, %s74
      %s92 = sphi 0, %s92
      %s94 = sphi 0, %s92
      %s95 = sphi 0, %s94
      %s109 = sphi 0, %s95
      %s115 = sphi 0, %s117
      %s118 = sphi 0, %s115
      %s119 = sphi 0, %s118
      %s135 = sphi 0, %s119
    $region4: #{tpu_custom_call.1} parent=1 // loop_header_branch
      %19 = sbr.rel (%p17) target = $region8
    $region5: #{tpu_custom_call.1} parent=1 // loop_body
      %s21 = ssub.s32 %s16, 1
      %s22 = ssub.s32 %s16, 2
      %s23 = sadd.s32 %s16, 1
      %s24 = ssub.s32 %s16, %s23
      %p25 = scmp.eq.s32.totalorder %s24, 0
      %s27 = sadd.s32 %s26, 1
      %s28 = scalar_select %p25, %s26, %s27
      %p31 = pneg %p25
      %p32 = scmp.eq.s32.totalorder %s16, 1
      %p33 = por %p31, %p32
      %p34 = scmp.ne.s32.totalorder %s26, %s29
      %p35 = scmp.eq.s32.totalorder %s16, 0
      %p36 = por %p34, %p35
      %p37 = scmp.ne.s32.totalorder %s26, %s29
      %p38 = scmp.eq.s32.totalorder %s21, 1
      %p39 = por %p37, %p38
      %p40 = scmp.ne.s32.totalorder %s29, %s30
      %p41 = scmp.eq.s32.totalorder %s21, 0
      %p42 = por %p40, %p41
      %p43 = scmp.ne.s32.totalorder %s29, %s30
      %p44 = scmp.eq.s32.totalorder %s22, 1
      %p45 = por %p43, %p44
      %p47 = scmp.ne.s32.totalorder %s30, %s46
      %p48 = scmp.eq.s32.totalorder %s22, 0
      %p49 = por %p47, %p48
      %s51 = sadd.s32 %s50, 1
      %p54 = scmp.eq.s32.totalorder %s16, 1
      %p55 = scmp.ne.s32.totalorder %s50, %s52
      %p56 = scmp.eq.s32.totalorder %s16, 0
      %p57 = por %p55, %p56
      %p58 = scmp.ne.s32.totalorder %s50, %s52
      %p59 = scmp.eq.s32.totalorder %s21, 1
      %p60 = por %p58, %p59
      %p61 = scmp.ne.s32.totalorder %s52, %s53
      %p62 = scmp.eq.s32.totalorder %s21, 0
      %p63 = por %p61, %p62
      %p64 = scmp.ne.s32.totalorder %s52, %s53
      %p65 = scmp.eq.s32.totalorder %s22, 1
      %p66 = por %p64, %p65
      %p68 = scmp.ne.s32.totalorder %s53, %s67
      %p69 = scmp.eq.s32.totalorder %s22, 0
      %p70 = por %p68, %p69
      %s72 = sadd.s32 %s71, 1
      %p75 = scmp.eq.s32.totalorder %s16, 1
      %p76 = scmp.ne.s32.totalorder %s71, %s73
      %p77 = scmp.eq.s32.totalorder %s16, 0
      %p78 = por %p76, %p77
      %p79 = scmp.ne.s32.totalorder %s71, %s73
      %p80 = scmp.eq.s32.totalorder %s21, 1
      %p81 = por %p79, %p80
      %p82 = scmp.ne.s32.totalorder %s73, %s74
      %p83 = scmp.eq.s32.totalorder %s21, 0
      %p84 = por %p82, %p83
      %p85 = scmp.ne.s32.totalorder %s73, %s74
      %p86 = scmp.eq.s32.totalorder %s22, 1
      %p87 = por %p85, %p86
      %p89 = scmp.ne.s32.totalorder %s74, %s88
      %p90 = scmp.eq.s32.totalorder %s22, 0
      %p91 = por %p89, %p90
      %s93 = sadd.s32 %s92, 1
      %p96 = scmp.eq.s32.totalorder %s16, 1
      %p97 = scmp.ne.s32.totalorder %s92, %s94
      %p98 = scmp.eq.s32.totalorder %s16, 0
      %p99 = por %p97, %p98
      %p100 = scmp.ne.s32.totalorder %s92, %s94
      %p101 = scmp.eq.s32.totalorder %s21, 1
      %p102 = por %p100, %p101
      %p103 = scmp.ne.s32.totalorder %s94, %s95
      %p104 = scmp.eq.s32.totalorder %s21, 0
      %p105 = por %p103, %p104
      %p106 = scmp.ne.s32.totalorder %s94, %s95
      %p107 = scmp.eq.s32.totalorder %s22, 1
      %p108 = por %p106, %p107
      %p110 = scmp.ne.s32.totalorder %s95, %s109
      %p111 = scmp.eq.s32.totalorder %s22, 0
      %p112 = por %p110, %p111
      %s113 = ssub.s32 %s16, %s23
      %p114 = scmp.eq.s32.totalorder %s113, 0
      %s116 = sadd.s32 %s115, 1
      %s117 = scalar_select %p114, %s115, %s116
      %p120 = pneg %p114
      %p121 = scmp.eq.s32.totalorder %s16, 1
      %p122 = por %p120, %p121
      %p123 = scmp.ne.s32.totalorder %s115, %s118
      %p124 = scmp.eq.s32.totalorder %s16, 0
      %p125 = por %p123, %p124
      %p126 = scmp.ne.s32.totalorder %s115, %s118
      %p127 = scmp.eq.s32.totalorder %s21, 1
      %p128 = por %p126, %p127
      %p129 = scmp.ne.s32.totalorder %s118, %s119
      %p130 = scmp.eq.s32.totalorder %s21, 0
      %p131 = por %p129, %p130
      %p132 = scmp.ne.s32.totalorder %s118, %s119
      %p133 = scmp.eq.s32.totalorder %s22, 1
      %p134 = por %p132, %p133
      %p136 = scmp.ne.s32.totalorder %s119, %s135
      %p137 = scmp.eq.s32.totalorder %s22, 0
      %p138 = por %p136, %p137
      %p139 = scmp.le.s32.totalorder 1, %s16
      %p140 = scmp.lt.s32.totalorder %s16, 3
      %p141 = pnand %p139, %p140
      %p142 = pneg %p141
      // Predicated region
      $region9: #{tpu_custom_call.1} parent=5 // pred_check
        _
      $region10: #{tpu_custom_call.1} parent=5 // pred_check_branch
        %144 = sbr.rel (%p141) target = $region12
      $region11: #{tpu_custom_call.1} parent=5 // pred_region
        %s145 = ssub.s32 %s16, 1
        // Predicated region
        $region13: #{tpu_custom_call.1} parent=11 // pred_check
          %p146 = pneg %p63
        $region14: #{tpu_custom_call.1} parent=11 // pred_check_branch
          %148 = sbr.rel (%p146) target = $region16
        $region15: #{tpu_custom_call.1} parent=11 // pred_region
          _
        $region16: #{tpu_custom_call.1} parent=11 // pred_fallthru
          _
        // Predicated region
        $region17: #{tpu_custom_call.1} parent=11 // pred_check
          %p149 = pneg %p84
        $region18: #{tpu_custom_call.1} parent=11 // pred_check_branch
          %151 = sbr.rel (%p149) target = $region20
        $region19: #{tpu_custom_call.1} parent=11 // pred_region
          _
        $region20: #{tpu_custom_call.1} parent=11 // pred_fallthru
          _
        // Predicated region
        $region21: #{tpu_custom_call.1} parent=11 // pred_check
          %p152 = pneg %p105
        $region22: #{tpu_custom_call.1} parent=11 // pred_check_branch
          %154 = sbr.rel (%p152) target = $region24
        $region23: #{tpu_custom_call.1} parent=11 // pred_region
          _
        $region24: #{tpu_custom_call.1} parent=11 // pred_fallthru
          _
      $region12: #{tpu_custom_call.1} parent=5 // pred_fallthru
        _
      %p155 = scmp.lt.s32.totalorder %s16, 2
      // Predicated region
      $region25: #{tpu_custom_call.1} parent=5 // pred_check
        %p156 = pneg %p155
      $region26: #{tpu_custom_call.1} parent=5 // pred_check_branch
        %158 = sbr.rel (%p156) target = $region28
      $region27: #{tpu_custom_call.1} parent=5 // pred_region
        // Predicated region
        $region29: #{tpu_custom_call.1} parent=27 // pred_check
          %p159 = pneg %p36
        $region30: #{tpu_custom_call.1} parent=27 // pred_check_branch
          %161 = sbr.rel (%p159) target = $region32
        $region31: #{tpu_custom_call.1} parent=27 // pred_region
          %s162 = sand.u32 %s26, 1
          %s163 = scalar_lea.sflag [#allocation3], %s162
          %s164 = sand.u32 %s26, 1
          %s165 = smul.addr %s164, 256
          %s166 = scalar_lea.vmem [#allocation2], %s165
          %s167 = smul.u32 4, %s16
          %s169 = ssub.s32 4096, 4096
          %170 = vsyncadd %s163, %s169
          %s171 = smul.addr %s167, 8
          %s172 = smul.addr %s171, 128
          %s173 = scalar_lea.hbm %s0, %s172
          %s174 = sshll.u32 %s166, 4
          %s175 = int_to_ptr.vmem [resolvable:$true] %s174
          %180 = dma.hbm_to_vmem [thread:$0]  %s173, 4096, %s175, %s163, 256, 256, 16
        $region32: #{tpu_custom_call.1} parent=27 // pred_fallthru
          _
      $region28: #{tpu_custom_call.1} parent=5 // pred_fallthru
        _
      %p181 = scmp.le.s32.totalorder 1, %s16
      %p182 = scmp.lt.s32.totalorder %s16, 3
      %p183 = pnand %p181, %p182
      %p184 = pneg %p183
      // Predicated region
      $region33: #{tpu_custom_call.1} parent=5 // pred_check
        _
      $region34: #{tpu_custom_call.1} parent=5 // pred_check_branch
        %186 = sbr.rel (%p183) target = $region36
      $region35: #{tpu_custom_call.1} parent=5 // pred_region
        %s187 = ssub.s32 %s16, 1
        %s188 = sand.u32 %s29, 1
        %s189 = scalar_lea.sflag [#allocation3], %s188
        %s190 = sand.u32 %s29, 1
        %s191 = smul.addr %s190, 256
        %s192 = scalar_lea.vmem [#allocation2], %s191
        // Predicated region
        $region37: #{tpu_custom_call.1} parent=35 // pred_check
          %p193 = pneg %p42
        $region38: #{tpu_custom_call.1} parent=35 // pred_check_branch
          %195 = sbr.rel (%p193) target = $region40
        $region39: #{tpu_custom_call.1} parent=35 // pred_region
          %196 = dma.done %s189, 4096
        $region40: #{tpu_custom_call.1} parent=35 // pred_fallthru
          _
        %s197 = sand.u32 %s29, 1
        %s198 = scalar_lea.sflag [#allocation3], %s197
        %s199 = sand.u32 %s29, 1
        %s200 = smul.addr %s199, 256
        %s201 = scalar_lea.vmem [#allocation2], %s200
        %p202 = pneg %p42
        %p203 = pneg %p39
        %p204 = pneg %p63
        %p205 = pneg %p60
        %p206 = pneg %p84
        %p207 = pneg %p81
        %p208 = pneg %p105
        %p209 = pneg %p102
        %p210 = pneg %p131
        %p211 = pneg %p128
        %s212 = sand.u32 %s118, 1
        %s213 = scalar_lea.sflag [#allocation4], %s212
        %s214 = sand.u32 %s118, 1
        %s215 = smul.addr %s214, 256
        %s216 = scalar_lea.vmem [#allocation5], %s215
        %s217 = smul.u32 4, %s21
        %s218 = smul.u32 4, %s21
        %v219 = vld [vmem:[%s192] sm:$0xff]
        %v220 = vld [vmem:[%s192 + $0x8] sm:$0xff]
        %v221 = vld [vmem:[%s192 + $0x10] sm:$0xff]
        %v222 = vld [vmem:[%s192 + $0x18] sm:$0xff]
        %v223 = vld [vmem:[%s192 + $0x20] sm:$0xff]
        %v224 = vld [vmem:[%s192 + $0x28] sm:$0xff]
        %v225 = vld [vmem:[%s192 + $0x30] sm:$0xff]
        %v226 = vld [vmem:[%s192 + $0x38] sm:$0xff]
        %v227 = vld [vmem:[%s192 + $0x40] sm:$0xff]
        %v228 = vld [vmem:[%s192 + $0x48] sm:$0xff]
        %v229 = vld [vmem:[%s192 + $0x50] sm:$0xff]
        %v230 = vld [vmem:[%s192 + $0x58] sm:$0xff]
        %v231 = vld [vmem:[%s192 + $0x60] sm:$0xff]
        %v232 = vld [vmem:[%s192 + $0x68] sm:$0xff]
        %v233 = vld [vmem:[%s192 + $0x70] sm:$0xff]
        %v234 = vld [vmem:[%s192 + $0x78] sm:$0xff]
        %v235 = vld [vmem:[%s192 + $0x80] sm:$0xff]
        %v236 = vld [vmem:[%s192 + $0x88] sm:$0xff]
        %v237 = vld [vmem:[%s192 + $0x90] sm:$0xff]
        %v238 = vld [vmem:[%s192 + $0x98] sm:$0xff]
        %v239 = vld [vmem:[%s192 + $0xa0] sm:$0xff]
        %v240 = vld [vmem:[%s192 + $0xa8] sm:$0xff]
        %v241 = vld [vmem:[%s192 + $0xb0] sm:$0xff]
        %v242 = vld [vmem:[%s192 + $0xb8] sm:$0xff]
        %v243 = vld [vmem:[%s192 + $0xc0] sm:$0xff]
        %v244 = vld [vmem:[%s192 + $0xc8] sm:$0xff]
        %v245 = vld [vmem:[%s192 + $0xd0] sm:$0xff]
        %v246 = vld [vmem:[%s192 + $0xd8] sm:$0xff]
        %v247 = vld [vmem:[%s192 + $0xe0] sm:$0xff]
        %v248 = vld [vmem:[%s192 + $0xe8] sm:$0xff]
        %v249 = vld [vmem:[%s192 + $0xf0] sm:$0xff]
        %v250 = vld [vmem:[%s192 + $0xf8] sm:$0xff]
        %v251 = vld [vmem:[%s1] sm:$0xff]
        %v252 = vld [vmem:[%s1 + $0x8] sm:$0xff]
        %v253 = vld [vmem:[%s1 + $0x10] sm:$0xff]
        %v254 = vld [vmem:[%s1 + $0x18] sm:$0xff]
        %v255 = vld [vmem:[%s1 + $0x20] sm:$0x1f]
        %v256 = vld [vmem:[%s1 + $0x28] sm:$0x1f]
        %257 = vmatprep.subr.mxu0 0.0
        %258 = vmatpush1.xpose.msra.mxu0 0.0
        %259 = vmatprep.subr.mxu0 0.0
        %260 = vmatpush1.xpose.msra.mxu0 0.0
        %261 = vmatprep.subr.mxu0 0.0
        %262 = vmatpush1.xpose.msra.mxu0 0.0
        %263 = vmatprep.subr.mxu0 0.0
        %264 = vmatpush1.xpose.msra.mxu0 0.0
        %265 = vmatprep.subr.mxu0 0.0
        %266 = vmatpush1.xpose.msra.mxu0 0.0
        %267 = vmatprep.subr.mxu0 0.0
        %268 = vmatpush1.xpose.msra.mxu0 0.0
        %269 = vmatprep.subr.mxu0 0.0
        %270 = vmatpush1.xpose.msra.mxu0 0.0
        %271 = vmatprep.subr.mxu0 0.0
        %272 = vmatpush1.xpose.msra.mxu0 0.0
        %273 = vmatprep.subr.mxu0 0.0
        %274 = vmatpush1.xpose.msra.mxu0 0.0
        %275 = vmatprep.subr.mxu0 0.0
        %276 = vmatpush1.xpose.msra.mxu0 0.0
        %277 = vmatprep.subr.mxu0 0.0
        %278 = vmatpush1.xpose.msra.mxu0 0.0
        %279 = vmatprep.subr.mxu0 0.0
        %280 = vmatpush1.xpose.msra.mxu0 0.0
        %281 = vmatprep.subr.mxu0 %v226
        %282 = vmatpush1.xpose.msra.mxu0 %v225
        %283 = vmatprep.subr.mxu0 %v224
        %284 = vmatpush1.xpose.msra.mxu0 %v223
        %285 = vmatprep.subr.mxu0 %v222
        %286 = vmatpush1.xpose.msra.mxu0 %v221
        %287 = vmatprep.subr.mxu0 %v220
        %288 = vmatpush1.xpose.msra.mxu0 %v219
        %289 = vmatprep.subr.mxu0 0.0
        %290 = vmatpush2.xpose.msra.mxu0 0.0
        %291 = vmatprep.subr.mxu0 0.0
        %292 = vmatpush2.xpose.msra.mxu0 0.0
        %293 = vmatprep.subr.mxu0 0.0
        %294 = vmatpush2.xpose.msra.mxu0 0.0
        %295 = vmatprep.subr.mxu0 0.0
        %296 = vmatpush2.xpose.msra.mxu0 0.0
        %297 = vmatprep.subr.mxu0 0.0
        %298 = vmatpush2.xpose.msra.mxu0 0.0
        %299 = vmatprep.subr.mxu0 0.0
        %300 = vmatpush2.xpose.msra.mxu0 0.0
        %301 = vmatprep.subr.mxu0 0.0
        %302 = vmatpush2.xpose.msra.mxu0 0.0
        %303 = vmatprep.subr.mxu0 0.0
        %304 = vmatpush2.xpose.msra.mxu0 0.0
        %305 = vmatprep.subr.mxu0 0.0
        %306 = vmatpush2.xpose.msra.mxu0 0.0
        %307 = vmatprep.subr.mxu0 0.0
        %308 = vmatpush2.xpose.msra.mxu0 0.0
        %309 = vmatprep.subr.mxu0 0.0
        %310 = vmatpush2.xpose.msra.mxu0 0.0
        %311 = vmatprep.subr.mxu0 0.0
        %312 = vmatpush2.xpose.msra.mxu0 0.0
        %313 = vmatprep.subr.mxu0 0.0
        %314 = vmatpush2.xpose.msra.mxu0 0.0
        %315 = vmatprep.subr.mxu0 0.0
        %316 = vmatpush2.xpose.msra.mxu0 0.0
        %317 = vmatprep.subr.mxu0 0.0
        %318 = vmatpush2.xpose.msra.mxu0 0.0
        %319 = vmatprep.subr.mxu0 0.0
        %320 = vmatpush2.xpose.msra.mxu0 0.0
        %321 = vmatprep.mubr.f32.mxu0 %v252
        %322 = vmatmul.mubr.f32.gmra.mxu0 %v251
        %v323 = vpop.f32.mrf.mxu0
        %v324 = vadd.f32 0.0, %v323
        %v325 = vpop.f32.mrf.mxu0
        %326 = vmatprep.mubr.f32.mxu0 %v254
        %327 = vmatmul.mubr.f32.gmra.mxu0 %v253
        %v328 = vpop.f32.mrf.mxu0
        %v329 = vadd.f32 0.0, %v328
        %v330 = vpop.f32.mrf.mxu0
        %331 = vmatprep.mubr.f32.mxu0 %v256
        %332 = vmatmul.mubr.f32.gmra.mxu0 %v255
        %v333 = vpop.f32.mrf.mxu0
        %v334 = vadd.f32 0.0, %v333
        %v335 = vpop.f32.mrf.mxu0
        %336 = vdwg.mxu0
        %337 = vmatprep.subr.mxu0 0.0
        %338 = vmatpush1.xpose.msra.mxu0 0.0
        %339 = vmatprep.subr.mxu0 0.0
        %340 = vmatpush1.xpose.msra.mxu0 0.0
        %341 = vmatprep.subr.mxu0 0.0
        %342 = vmatpush1.xpose.msra.mxu0 0.0
        %343 = vmatprep.subr.mxu0 0.0
        %344 = vmatpush1.xpose.msra.mxu0 0.0
        %345 = vmatprep.subr.mxu0 0.0
        %346 = vmatpush1.xpose.msra.mxu0 0.0
        %347 = vmatprep.subr.mxu0 0.0
        %348 = vmatpush1.xpose.msra.mxu0 0.0
        %349 = vmatprep.subr.mxu0 0.0
        %350 = vmatpush1.xpose.msra.mxu0 0.0
        %351 = vmatprep.subr.mxu0 0.0
        %352 = vmatpush1.xpose.msra.mxu0 0.0
        %353 = vmatprep.subr.mxu0 0.0
        %354 = vmatpush1.xpose.msra.mxu0 0.0
        %355 = vmatprep.subr.mxu0 0.0
        %356 = vmatpush1.xpose.msra.mxu0 0.0
        %357 = vmatprep.subr.mxu0 0.0
        %358 = vmatpush1.xpose.msra.mxu0 0.0
        %359 = vmatprep.subr.mxu0 0.0
        %360 = vmatpush1.xpose.msra.mxu0 0.0
        %361 = vmatprep.subr.mxu0 %v234
        %362 = vmatpush1.xpose.msra.mxu0 %v233
        %363 = vmatprep.subr.mxu0 %v232
        %364 = vmatpush1.xpose.msra.mxu0 %v231
        %365 = vmatprep.subr.mxu0 %v230
        %366 = vmatpush1.xpose.msra.mxu0 %v229
        %367 = vmatprep.subr.mxu0 %v228
        %368 = vmatpush1.xpose.msra.mxu0 %v227
        %369 = vmatprep.subr.mxu0 0.0
        %370 = vmatpush2.xpose.msra.mxu0 0.0
        %371 = vmatprep.subr.mxu0 0.0
        %372 = vmatpush2.xpose.msra.mxu0 0.0
        %373 = vmatprep.subr.mxu0 0.0
        %374 = vmatpush2.xpose.msra.mxu0 0.0
        %375 = vmatprep.subr.mxu0 0.0
        %376 = vmatpush2.xpose.msra.mxu0 0.0
        %377 = vmatprep.subr.mxu0 0.0
        %378 = vmatpush2.xpose.msra.mxu0 0.0
        %379 = vmatprep.subr.mxu0 0.0
        %380 = vmatpush2.xpose.msra.mxu0 0.0
        %381 = vmatprep.subr.mxu0 0.0
        %382 = vmatpush2.xpose.msra.mxu0 0.0
        %383 = vmatprep.subr.mxu0 0.0
        %384 = vmatpush2.xpose.msra.mxu0 0.0
        %385 = vmatprep.subr.mxu0 0.0
        %386 = vmatpush2.xpose.msra.mxu0 0.0
        %387 = vmatprep.subr.mxu0 0.0
        %388 = vmatpush2.xpose.msra.mxu0 0.0
        %389 = vmatprep.subr.mxu0 0.0
        %390 = vmatpush2.xpose.msra.mxu0 0.0
        %391 = vmatprep.subr.mxu0 0.0
        %392 = vmatpush2.xpose.msra.mxu0 0.0
        %393 = vmatprep.subr.mxu0 0.0
        %394 = vmatpush2.xpose.msra.mxu0 0.0
        %395 = vmatprep.subr.mxu0 0.0
        %396 = vmatpush2.xpose.msra.mxu0 0.0
        %397 = vmatprep.subr.mxu0 0.0
        %398 = vmatpush2.xpose.msra.mxu0 0.0
        %399 = vmatprep.subr.mxu0 0.0
        %400 = vmatpush2.xpose.msra.mxu0 0.0
        %401 = vmatprep.mubr.f32.mxu0 %v252
        %402 = vmatmul.mubr.f32.gmra.mxu0 %v251
        %v403 = vpop.f32.mrf.mxu0
        %v404 = vadd.f32 0.0, %v403
        %v405 = vpop.f32.mrf.mxu0
        %406 = vmatprep.mubr.f32.mxu0 %v254
        %407 = vmatmul.mubr.f32.gmra.mxu0 %v253
        %v408 = vpop.f32.mrf.mxu0
        %v409 = vadd.f32 0.0, %v408
        %v410 = vpop.f32.mrf.mxu0
        %411 = vmatprep.mubr.f32.mxu0 %v256
        %412 = vmatmul.mubr.f32.gmra.mxu0 %v255
        %v413 = vpop.f32.mrf.mxu0
        %v414 = vadd.f32 0.0, %v413
        %v415 = vpop.f32.mrf.mxu0
        %416 = vdwg.mxu0
        %417 = vmatprep.subr.mxu0 0.0
        %418 = vmatpush1.xpose.msra.mxu0 0.0
        %419 = vmatprep.subr.mxu0 0.0
        %420 = vmatpush1.xpose.msra.mxu0 0.0
        %421 = vmatprep.subr.mxu0 0.0
        %422 = vmatpush1.xpose.msra.mxu0 0.0
        %423 = vmatprep.subr.mxu0 0.0
        %424 = vmatpush1.xpose.msra.mxu0 0.0
        %425 = vmatprep.subr.mxu0 0.0
        %426 = vmatpush1.xpose.msra.mxu0 0.0
        %427 = vmatprep.subr.mxu0 0.0
        %428 = vmatpush1.xpose.msra.mxu0 0.0
        %429 = vmatprep.subr.mxu0 0.0
        %430 = vmatpush1.xpose.msra.mxu0 0.0
        %431 = vmatprep.subr.mxu0 0.0
        %432 = vmatpush1.xpose.msra.mxu0 0.0
        %433 = vmatprep.subr.mxu0 0.0
        %434 = vmatpush1.xpose.msra.mxu0 0.0
        %435 = vmatprep.subr.mxu0 0.0
        %436 = vmatpush1.xpose.msra.mxu0 0.0
        %437 = vmatprep.subr.mxu0 0.0
        %438 = vmatpush1.xpose.msra.mxu0 0.0
        %439 = vmatprep.subr.mxu0 0.0
        %440 = vmatpush1.xpose.msra.mxu0 0.0
        %441 = vmatprep.subr.mxu0 %v242
        %442 = vmatpush1.xpose.msra.mxu0 %v241
        %443 = vmatprep.subr.mxu0 %v240
        %444 = vmatpush1.xpose.msra.mxu0 %v239
        %445 = vmatprep.subr.mxu0 %v238
        %446 = vmatpush1.xpose.msra.mxu0 %v237
        %447 = vmatprep.subr.mxu0 %v236
        %448 = vmatpush1.xpose.msra.mxu0 %v235
        %449 = vmatprep.subr.mxu0 0.0
        %450 = vmatpush2.xpose.msra.mxu0 0.0
        %451 = vmatprep.subr.mxu0 0.0
        %452 = vmatpush2.xpose.msra.mxu0 0.0
        %453 = vmatprep.subr.mxu0 0.0
        %454 = vmatpush2.xpose.msra.mxu0 0.0
        %455 = vmatprep.subr.mxu0 0.0
        %456 = vmatpush2.xpose.msra.mxu0 0.0
        %457 = vmatprep.subr.mxu0 0.0
        %458 = vmatpush2.xpose.msra.mxu0 0.0
        %459 = vmatprep.subr.mxu0 0.0
        %460 = vmatpush2.xpose.msra.mxu0 0.0
        %461 = vmatprep.subr.mxu0 0.0
        %462 = vmatpush2.xpose.msra.mxu0 0.0
        %463 = vmatprep.subr.mxu0 0.0
        %464 = vmatpush2.xpose.msra.mxu0 0.0
        %465 = vmatprep.subr.mxu0 0.0
        %466 = vmatpush2.xpose.msra.mxu0 0.0
        %467 = vmatprep.subr.mxu0 0.0
        %468 = vmatpush2.xpose.msra.mxu0 0.0
        %469 = vmatprep.subr.mxu0 0.0
        %470 = vmatpush2.xpose.msra.mxu0 0.0
        %471 = vmatprep.subr.mxu0 0.0
        %472 = vmatpush2.xpose.msra.mxu0 0.0
        %473 = vmatprep.subr.mxu0 0.0
        %474 = vmatpush2.xpose.msra.mxu0 0.0
        %475 = vmatprep.subr.mxu0 0.0
        %476 = vmatpush2.xpose.msra.mxu0 0.0
        %477 = vmatprep.subr.mxu0 0.0
        %478 = vmatpush2.xpose.msra.mxu0 0.0
        %479 = vmatprep.subr.mxu0 0.0
        %480 = vmatpush2.xpose.msra.mxu0 0.0
        %481 = vmatprep.mubr.f32.mxu0 %v252
        %482 = vmatmul.mubr.f32.gmra.mxu0 %v251
        %v483 = vpop.f32.mrf.mxu0
        %v484 = vadd.f32 0.0, %v483
        %v485 = vpop.f32.mrf.mxu0
        %486 = vmatprep.mubr.f32.mxu0 %v254
        %487 = vmatmul.mubr.f32.gmra.mxu0 %v253
        %v488 = vpop.f32.mrf.mxu0
        %v489 = vadd.f32 0.0, %v488
        %v490 = vpop.f32.mrf.mxu0
        %491 = vmatprep.mubr.f32.mxu0 %v256
        %492 = vmatmul.mubr.f32.gmra.mxu0 %v255
        %v493 = vpop.f32.mrf.mxu0
        %v494 = vadd.f32 0.0, %v493
        %v495 = vpop.f32.mrf.mxu0
        %496 = vdwg.mxu0
        %497 = vmatprep.subr.mxu0 0.0
        %498 = vmatpush1.xpose.msra.mxu0 0.0
        %499 = vmatprep.subr.mxu0 0.0
        %500 = vmatpush1.xpose.msra.mxu0 0.0
        %501 = vmatprep.subr.mxu0 0.0
        %502 = vmatpush1.xpose.msra.mxu0 0.0
        %503 = vmatprep.subr.mxu0 0.0
        %504 = vmatpush1.xpose.msra.mxu0 0.0
        %505 = vmatprep.subr.mxu0 0.0
        %506 = vmatpush1.xpose.msra.mxu0 0.0
        %507 = vmatprep.subr.mxu0 0.0
        %508 = vmatpush1.xpose.msra.mxu0 0.0
        %509 = vmatprep.subr.mxu0 0.0
        %510 = vmatpush1.xpose.msra.mxu0 0.0
        %511 = vmatprep.subr.mxu0 0.0
        %512 = vmatpush1.xpose.msra.mxu0 0.0
        %513 = vmatprep.subr.mxu0 0.0
        %514 = vmatpush1.xpose.msra.mxu0 0.0
        %515 = vmatprep.subr.mxu0 0.0
        %516 = vmatpush1.xpose.msra.mxu0 0.0
        %517 = vmatprep.subr.mxu0 0.0
        %518 = vmatpush1.xpose.msra.mxu0 0.0
        %519 = vmatprep.subr.mxu0 0.0
        %520 = vmatpush1.xpose.msra.mxu0 0.0
        %521 = vmatprep.subr.mxu0 %v250
        %522 = vmatpush1.xpose.msra.mxu0 %v249
        %523 = vmatprep.subr.mxu0 %v248
        %524 = vmatpush1.xpose.msra.mxu0 %v247
        %525 = vmatprep.subr.mxu0 %v246
        %526 = vmatpush1.xpose.msra.mxu0 %v245
        %527 = vmatprep.subr.mxu0 %v244
        %528 = vmatpush1.xpose.msra.mxu0 %v243
        %529 = vmatprep.subr.mxu0 0.0
        %530 = vmatpush2.xpose.msra.mxu0 0.0
        %531 = vmatprep.subr.mxu0 0.0
        %532 = vmatpush2.xpose.msra.mxu0 0.0
        %533 = vmatprep.subr.mxu0 0.0
        %534 = vmatpush2.xpose.msra.mxu0 0.0
        %535 = vmatprep.subr.mxu0 0.0
        %536 = vmatpush2.xpose.msra.mxu0 0.0
        %537 = vmatprep.subr.mxu0 0.0
        %538 = vmatpush2.xpose.msra.mxu0 0.0
        %539 = vmatprep.subr.mxu0 0.0
        %540 = vmatpush2.xpose.msra.mxu0 0.0
        %541 = vmatprep.subr.mxu0 0.0
        %542 = vmatpush2.xpose.msra.mxu0 0.0
        %543 = vmatprep.subr.mxu0 0.0
        %544 = vmatpush2.xpose.msra.mxu0 0.0
        %545 = vmatprep.subr.mxu0 0.0
        %546 = vmatpush2.xpose.msra.mxu0 0.0
        %547 = vmatprep.subr.mxu0 0.0
        %548 = vmatpush2.xpose.msra.mxu0 0.0
        %549 = vmatprep.subr.mxu0 0.0
        %550 = vmatpush2.xpose.msra.mxu0 0.0
        %551 = vmatprep.subr.mxu0 0.0
        %552 = vmatpush2.xpose.msra.mxu0 0.0
        %553 = vmatprep.subr.mxu0 0.0
        %554 = vmatpush2.xpose.msra.mxu0 0.0
        %555 = vmatprep.subr.mxu0 0.0
        %556 = vmatpush2.xpose.msra.mxu0 0.0
        %557 = vmatprep.subr.mxu0 0.0
        %558 = vmatpush2.xpose.msra.mxu0 0.0
        %559 = vmatprep.subr.mxu0 0.0
        %560 = vmatpush2.xpose.msra.mxu0 0.0
        %561 = vmatprep.mubr.f32.mxu0 %v252
        %562 = vmatmul.mubr.f32.gmra.mxu0 %v251
        %v563 = vpop.f32.mrf.mxu0
        %v564 = vadd.f32 0.0, %v563
        %v565 = vpop.f32.mrf.mxu0
        %566 = vmatprep.mubr.f32.mxu0 %v254
        %567 = vmatmul.mubr.f32.gmra.mxu0 %v253
        %v568 = vpop.f32.mrf.mxu0
        %v569 = vadd.f32 0.0, %v568
        %v570 = vpop.f32.mrf.mxu0
        %571 = vmatprep.mubr.f32.mxu0 %v256
        %572 = vmatmul.mubr.f32.gmra.mxu0 %v255
        %v573 = vpop.f32.mrf.mxu0
        %v574 = vadd.f32 0.0, %v573
        %v575 = vpop.f32.mrf.mxu0
        %576 = vdwg.mxu0
        %v577 = vld [vmem:[%s2] sm:$0xff]
        %v578 = vld [vmem:[%s2 + $0x8] sm:$0xff]
        %v579 = vld [vmem:[%s2 + $0x10] sm:$0x1f]
        %v580 = vmul.f32 %v324, %v577
        %v581 = vmul.f32 %v329, %v578
        %v582 = vmul.f32 %v334, %v579
        %v583 = vmul.f32 %v404, %v577
        %v584 = vmul.f32 %v409, %v578
        %v585 = vmul.f32 %v414, %v579
        %v586 = vmul.f32 %v484, %v577
        %v587 = vmul.f32 %v489, %v578
        %v588 = vmul.f32 %v494, %v579
        %v589 = vmul.f32 %v564, %v577
        %v590 = vmul.f32 %v569, %v578
        %v591 = vmul.f32 %v574, %v579
        %vm592 = vcmask 261120
        %v593 = vsel %vm592, %v580, 0.0
        %594 = vadd.xlane.f32.xlu0 %v593
        %v595 = vpop.xlane.xlu0 %594
        %v596 = vsel %vm592, %v581, 0.0
        %597 = vadd.xlane.f32.xlu0 %v596
        %v598 = vpop.xlane.xlu0 %597
        %vm599 = vcmask 258048
        %v600 = vsel %vm599, %v582, 0.0
        %601 = vadd.xlane.f32.xlu0 %v600
        %v602 = vpop.xlane.xlu0 %601
        %v603 = vsel %vm592, %v583, 0.0
        %604 = vadd.xlane.f32.xlu0 %v603
        %v605 = vpop.xlane.xlu0 %604
        %v606 = vsel %vm592, %v584, 0.0
        %607 = vadd.xlane.f32.xlu0 %v606
        %v608 = vpop.xlane.xlu0 %607
        %v609 = vsel %vm599, %v585, 0.0
        %610 = vadd.xlane.f32.xlu0 %v609
        %v611 = vpop.xlane.xlu0 %610
        %v612 = vsel %vm592, %v586, 0.0
        %613 = vadd.xlane.f32.xlu0 %v612
        %v614 = vpop.xlane.xlu0 %613
        %v615 = vsel %vm592, %v587, 0.0
        %616 = vadd.xlane.f32.xlu0 %v615
        %v617 = vpop.xlane.xlu0 %616
        %v618 = vsel %vm599, %v588, 0.0
        %619 = vadd.xlane.f32.xlu0 %v618
        %v620 = vpop.xlane.xlu0 %619
        %v621 = vsel %vm592, %v589, 0.0
        %622 = vadd.xlane.f32.xlu0 %v621
        %v623 = vpop.xlane.xlu0 %622
        %v624 = vsel %vm592, %v590, 0.0
        %625 = vadd.xlane.f32.xlu0 %v624
        %v626 = vpop.xlane.xlu0 %625
        %v627 = vsel %vm599, %v591, 0.0
        %628 = vadd.xlane.f32.xlu0 %v627
        %v629 = vpop.xlane.xlu0 %628
        %v630 = vadd.f32 %v595, %v598
        %vm631 = vcmask 1044480
        %v632 = vsel %vm631, %v602, 0.0
        %v633 = vadd.f32 %v630, %v632
        %v634 = vrot.slane %v633, 4
        %v635 = vadd.f32 %v633, %v634
        %v636 = vrot.slane %v635, 2
        %v637 = vadd.f32 %v635, %v636
        %v638 = vrot.slane %v637, 1
        %v639 = vadd.f32 %v637, %v638
        %v640 = vadd.f32 %v605, %v608
        %v641 = vsel %vm631, %v611, 0.0
        %v642 = vadd.f32 %v640, %v641
        %v643 = vrot.slane %v642, 4
        %v644 = vadd.f32 %v642, %v643
        %v645 = vrot.slane %v644, 2
        %v646 = vadd.f32 %v644, %v645
        %v647 = vrot.slane %v646, 1
        %v648 = vadd.f32 %v646, %v647
        %v649 = vadd.f32 %v614, %v617
        %v650 = vsel %vm631, %v620, 0.0
        %v651 = vadd.f32 %v649, %v650
        %v652 = vrot.slane %v651, 4
        %v653 = vadd.f32 %v651, %v652
        %v654 = vrot.slane %v653, 2
        %v655 = vadd.f32 %v653, %v654
        %v656 = vrot.slane %v655, 1
        %v657 = vadd.f32 %v655, %v656
        %v658 = vadd.f32 %v623, %v626
        %v659 = vsel %vm631, %v629, 0.0
        %v660 = vadd.f32 %v658, %v659
        %v661 = vrot.slane %v660, 4
        %v662 = vadd.f32 %v660, %v661
        %v663 = vrot.slane %v662, 2
        %v664 = vadd.f32 %v662, %v663
        %v665 = vrot.slane %v664, 1
        %v666 = vadd.f32 %v664, %v665
        %v667 = vmax.f32 %v639, 0.0
        %v668 = vmax.f32 %v648, 0.0
        %v669 = vmax.f32 %v657, 0.0
        %v670 = vmax.f32 %v666, 0.0
        %v671 = vld [vmem:[%s3] sm:$0xff]
        %v672 = vld [vmem:[%s3 + $0x8] sm:$0xff]
        %v673 = vld [vmem:[%s3 + $0x10] sm:$0xff]
        %v674 = vld [vmem:[%s3 + $0x18] sm:$0xff]
        %v675 = vmul.f32 %v667, %v671
        %v676 = vmul.f32 %v667, %v672
        %v677 = vmul.f32 %v667, %v673
        %v678 = vmul.f32 %v667, %v674
        %v679 = vmul.f32 %v668, %v671
        %v680 = vmul.f32 %v668, %v672
        %v681 = vmul.f32 %v668, %v673
        %v682 = vmul.f32 %v668, %v674
        %v683 = vmul.f32 %v669, %v671
        %v684 = vmul.f32 %v669, %v672
        %v685 = vmul.f32 %v669, %v673
        %v686 = vmul.f32 %v669, %v674
        %v687 = vmul.f32 %v670, %v671
        %v688 = vmul.f32 %v670, %v672
        %v689 = vmul.f32 %v670, %v673
        %v690 = vmul.f32 %v670, %v674
        %v691 = vadd.f32 %v675, 0.0
        %v692 = vadd.f32 %v676, 0.0
        %v693 = vadd.f32 %v677, 0.0
        %v694 = vadd.f32 %v678, 0.0
        %v695 = vadd.f32 %v679, 0.0
        %v696 = vadd.f32 %v680, 0.0
        %v697 = vadd.f32 %v681, 0.0
        %v698 = vadd.f32 %v682, 0.0
        %v699 = vadd.f32 %v683, 0.0
        %v700 = vadd.f32 %v684, 0.0
        %v701 = vadd.f32 %v685, 0.0
        %v702 = vadd.f32 %v686, 0.0
        %v703 = vadd.f32 %v687, 0.0
        %v704 = vadd.f32 %v688, 0.0
        %v705 = vadd.f32 %v689, 0.0
        %v706 = vadd.f32 %v690, 0.0
        %s707 = scalar_lea.vmem %s2, 24
        %v708 = vld [vmem:[%s707] sm:$0xff]
        %v709 = vld [vmem:[%s707 + $0x8] sm:$0xff]
        %v710 = vld [vmem:[%s707 + $0x10] sm:$0x1f]
        %v711 = vmul.f32 %v324, %v708
        %v712 = vmul.f32 %v329, %v709
        %v713 = vmul.f32 %v334, %v710
        %v714 = vmul.f32 %v404, %v708
        %v715 = vmul.f32 %v409, %v709
        %v716 = vmul.f32 %v414, %v710
        %v717 = vmul.f32 %v484, %v708
        %v718 = vmul.f32 %v489, %v709
        %v719 = vmul.f32 %v494, %v710
        %v720 = vmul.f32 %v564, %v708
        %v721 = vmul.f32 %v569, %v709
        %v722 = vmul.f32 %v574, %v710
        %v723 = vsel %vm592, %v711, 0.0
        %724 = vadd.xlane.f32.xlu0 %v723
        %v725 = vpop.xlane.xlu0 %724
        %v726 = vsel %vm592, %v712, 0.0
        %727 = vadd.xlane.f32.xlu0 %v726
        %v728 = vpop.xlane.xlu0 %727
        %v729 = vsel %vm599, %v713, 0.0
        %730 = vadd.xlane.f32.xlu0 %v729
        %v731 = vpop.xlane.xlu0 %730
        %v732 = vsel %vm592, %v714, 0.0
        %733 = vadd.xlane.f32.xlu0 %v732
        %v734 = vpop.xlane.xlu0 %733
        %v735 = vsel %vm592, %v715, 0.0
        %736 = vadd.xlane.f32.xlu0 %v735
        %v737 = vpop.xlane.xlu0 %736
        %v738 = vsel %vm599, %v716, 0.0
        %739 = vadd.xlane.f32.xlu0 %v738
        %v740 = vpop.xlane.xlu0 %739
        %v741 = vsel %vm592, %v717, 0.0
        %742 = vadd.xlane.f32.xlu0 %v741
        %v743 = vpop.xlane.xlu0 %742
        %v744 = vsel %vm592, %v718, 0.0
        %745 = vadd.xlane.f32.xlu0 %v744
        %v746 = vpop.xlane.xlu0 %745
        %v747 = vsel %vm599, %v719, 0.0
        %748 = vadd.xlane.f32.xlu0 %v747
        %v749 = vpop.xlane.xlu0 %748
        %v750 = vsel %vm592, %v720, 0.0
        %751 = vadd.xlane.f32.xlu0 %v750
        %v752 = vpop.xlane.xlu0 %751
        %v753 = vsel %vm592, %v721, 0.0
        %754 = vadd.xlane.f32.xlu0 %v753
        %v755 = vpop.xlane.xlu0 %754
        %v756 = vsel %vm599, %v722, 0.0
        %757 = vadd.xlane.f32.xlu0 %v756
        %v758 = vpop.xlane.xlu0 %757
        %v759 = vadd.f32 %v725, %v728
        %v760 = vsel %vm631, %v731, 0.0
        %v761 = vadd.f32 %v759, %v760
        %v762 = vrot.slane %v761, 4
        %v763 = vadd.f32 %v761, %v762
        %v764 = vrot.slane %v763, 2
        %v765 = vadd.f32 %v763, %v764
        %v766 = vrot.slane %v765, 1
        %v767 = vadd.f32 %v765, %v766
        %v768 = vadd.f32 %v734, %v737
        %v769 = vsel %vm631, %v740, 0.0
        %v770 = vadd.f32 %v768, %v769
        %v771 = vrot.slane %v770, 4
        %v772 = vadd.f32 %v770, %v771
        %v773 = vrot.slane %v772, 2
        %v774 = vadd.f32 %v772, %v773
        %v775 = vrot.slane %v774, 1
        %v776 = vadd.f32 %v774, %v775
        %v777 = vadd.f32 %v743, %v746
        %v778 = vsel %vm631, %v749, 0.0
        %v779 = vadd.f32 %v777, %v778
        %v780 = vrot.slane %v779, 4
        %v781 = vadd.f32 %v779, %v780
        %v782 = vrot.slane %v781, 2
        %v783 = vadd.f32 %v781, %v782
        %v784 = vrot.slane %v783, 1
        %v785 = vadd.f32 %v783, %v784
        %v786 = vadd.f32 %v752, %v755
        %v787 = vsel %vm631, %v758, 0.0
        %v788 = vadd.f32 %v786, %v787
        %v789 = vrot.slane %v788, 4
        %v790 = vadd.f32 %v788, %v789
        %v791 = vrot.slane %v790, 2
        %v792 = vadd.f32 %v790, %v791
        %v793 = vrot.slane %v792, 1
        %v794 = vadd.f32 %v792, %v793
        %v795 = vmax.f32 %v767, 0.0
        %v796 = vmax.f32 %v776, 0.0
        %v797 = vmax.f32 %v785, 0.0
        %v798 = vmax.f32 %v794, 0.0
        %v799 = vmul.f32 %v795, %v671
        %v800 = vmul.f32 %v795, %v672
        %v801 = vmul.f32 %v795, %v673
        %v802 = vmul.f32 %v795, %v674
        %v803 = vmul.f32 %v796, %v671
        %v804 = vmul.f32 %v796, %v672
        %v805 = vmul.f32 %v796, %v673
        %v806 = vmul.f32 %v796, %v674
        %v807 = vmul.f32 %v797, %v671
        %v808 = vmul.f32 %v797, %v672
        %v809 = vmul.f32 %v797, %v673
        %v810 = vmul.f32 %v797, %v674
        %v811 = vmul.f32 %v798, %v671
        %v812 = vmul.f32 %v798, %v672
        %v813 = vmul.f32 %v798, %v673
        %v814 = vmul.f32 %v798, %v674
        %831 = vrot.lane.b32.xlu0 %v799, 127
        %v832 = vpop.permute.xlu0 %831
        %833 = vrot.lane.b32.xlu0 %v800, 127
        %v834 = vpop.permute.xlu0 %833
        %835 = vrot.lane.b32.xlu0 %v801, 127
        %v836 = vpop.permute.xlu0 %835
        %837 = vrot.lane.b32.xlu0 %v802, 127
        %v838 = vpop.permute.xlu0 %837
        %839 = vrot.lane.b32.xlu0 %v803, 127
        %v840 = vpop.permute.xlu0 %839
        %841 = vrot.lane.b32.xlu0 %v804, 127
        %v842 = vpop.permute.xlu0 %841
        %843 = vrot.lane.b32.xlu0 %v805, 127
        %v844 = vpop.permute.xlu0 %843
        %845 = vrot.lane.b32.xlu0 %v806, 127
        %v846 = vpop.permute.xlu0 %845
        %847 = vrot.lane.b32.xlu0 %v807, 127
        %v848 = vpop.permute.xlu0 %847
        %849 = vrot.lane.b32.xlu0 %v808, 127
        %v850 = vpop.permute.xlu0 %849
        %851 = vrot.lane.b32.xlu0 %v809, 127
        %v852 = vpop.permute.xlu0 %851
        %853 = vrot.lane.b32.xlu0 %v810, 127
        %v854 = vpop.permute.xlu0 %853
        %855 = vrot.lane.b32.xlu0 %v811, 127
        %v856 = vpop.permute.xlu0 %855
        %857 = vrot.lane.b32.xlu0 %v812, 127
        %v858 = vpop.permute.xlu0 %857
        %859 = vrot.lane.b32.xlu0 %v813, 127
        %v860 = vpop.permute.xlu0 %859
        %861 = vrot.lane.b32.xlu0 %v814, 127
        %v862 = vpop.permute.xlu0 %861
        %v879 = vadd.f32 %v691, %v832
        %v880 = vadd.f32 %v692, %v834
        %v881 = vadd.f32 %v693, %v836
        %v882 = vadd.f32 %v694, %v838
        %v883 = vadd.f32 %v695, %v840
        %v884 = vadd.f32 %v696, %v842
        %v885 = vadd.f32 %v697, %v844
        %v886 = vadd.f32 %v698, %v846
        %v887 = vadd.f32 %v699, %v848
        %v888 = vadd.f32 %v700, %v850
        %v889 = vadd.f32 %v701, %v852
        %v890 = vadd.f32 %v702, %v854
        %v891 = vadd.f32 %v703, %v856
        %v892 = vadd.f32 %v704, %v858
        %v893 = vadd.f32 %v705, %v860
        %v894 = vadd.f32 %v706, %v862
        %v895 = vxor.u32 %v879, 2147483648
        %v896 = vxor.u32 %v880, 2147483648
        %v897 = vxor.u32 %v881, 2147483648
        %v898 = vxor.u32 %v882, 2147483648
        %v899 = vxor.u32 %v883, 2147483648
        %v900 = vxor.u32 %v884, 2147483648
        %v901 = vxor.u32 %v885, 2147483648
        %v902 = vxor.u32 %v886, 2147483648
        %v903 = vxor.u32 %v887, 2147483648
        %v904 = vxor.u32 %v888, 2147483648
        %v905 = vxor.u32 %v889, 2147483648
        %v906 = vxor.u32 %v890, 2147483648
        %v907 = vxor.u32 %v891, 2147483648
        %v908 = vxor.u32 %v892, 2147483648
        %v909 = vxor.u32 %v893, 2147483648
        %v910 = vxor.u32 %v894, 2147483648
        %v911 = vmul.f32 %v895, 1.442695
        %v912 = vpow.pop %v911
        %v913 = vmul.f32 %v896, 1.442695
        %v914 = vpow.pop %v913
        %v915 = vmul.f32 %v897, 1.442695
        %v916 = vpow.pop %v915
        %v917 = vmul.f32 %v898, 1.442695
        %v918 = vpow.pop %v917
        %v919 = vmul.f32 %v899, 1.442695
        %v920 = vpow.pop %v919
        %v921 = vmul.f32 %v900, 1.442695
        %v922 = vpow.pop %v921
        %v923 = vmul.f32 %v901, 1.442695
        %v924 = vpow.pop %v923
        %v925 = vmul.f32 %v902, 1.442695
        %v926 = vpow.pop %v925
        %v927 = vmul.f32 %v903, 1.442695
        %v928 = vpow.pop %v927
        %v929 = vmul.f32 %v904, 1.442695
        %v930 = vpow.pop %v929
        %v931 = vmul.f32 %v905, 1.442695
        %v932 = vpow.pop %v931
        %v933 = vmul.f32 %v906, 1.442695
        %v934 = vpow.pop %v933
        %v935 = vmul.f32 %v907, 1.442695
        %v936 = vpow.pop %v935
        %v937 = vmul.f32 %v908, 1.442695
        %v938 = vpow.pop %v937
        %v939 = vmul.f32 %v909, 1.442695
        %v940 = vpow.pop %v939
        %v941 = vmul.f32 %v910, 1.442695
        %v942 = vpow.pop %v941
        %v943 = vadd.f32 %v912, 1.0
        %v944 = vadd.f32 %v914, 1.0
        %v945 = vadd.f32 %v916, 1.0
        %v946 = vadd.f32 %v918, 1.0
        %v947 = vadd.f32 %v920, 1.0
        %v948 = vadd.f32 %v922, 1.0
        %v949 = vadd.f32 %v924, 1.0
        %v950 = vadd.f32 %v926, 1.0
        %v951 = vadd.f32 %v928, 1.0
        %v952 = vadd.f32 %v930, 1.0
        %v953 = vadd.f32 %v932, 1.0
        %v954 = vadd.f32 %v934, 1.0
        %v955 = vadd.f32 %v936, 1.0
        %v956 = vadd.f32 %v938, 1.0
        %v957 = vadd.f32 %v940, 1.0
        %v958 = vadd.f32 %v942, 1.0
        %v959 = vrcp.pop %v943
        %v960 = vmul.f32 1.0, %v959
        %v961 = vrcp.pop %v944
        %v962 = vmul.f32 1.0, %v961
        %v963 = vrcp.pop %v945
        %v964 = vmul.f32 1.0, %v963
        %v965 = vrcp.pop %v946
        %v966 = vmul.f32 1.0, %v965
        %v967 = vrcp.pop %v947
        %v968 = vmul.f32 1.0, %v967
        %v969 = vrcp.pop %v948
        %v970 = vmul.f32 1.0, %v969
        %v971 = vrcp.pop %v949
        %v972 = vmul.f32 1.0, %v971
        %v973 = vrcp.pop %v950
        %v974 = vmul.f32 1.0, %v973
        %v975 = vrcp.pop %v951
        %v976 = vmul.f32 1.0, %v975
        %v977 = vrcp.pop %v952
        %v978 = vmul.f32 1.0, %v977
        %v979 = vrcp.pop %v953
        %v980 = vmul.f32 1.0, %v979
        %v981 = vrcp.pop %v954
        %v982 = vmul.f32 1.0, %v981
        %v983 = vrcp.pop %v955
        %v984 = vmul.f32 1.0, %v983
        %v985 = vrcp.pop %v956
        %v986 = vmul.f32 1.0, %v985
        %v987 = vrcp.pop %v957
        %v988 = vmul.f32 1.0, %v987
        %v989 = vrcp.pop %v958
        %v990 = vmul.f32 1.0, %v989
        %v991 = vld [vmem:[%s192] sm:$0xff]
        %v992 = vld [vmem:[%s192 + $0x8] sm:$0xff]
        %v993 = vld [vmem:[%s192 + $0x10] sm:$0xff]
        %v994 = vld [vmem:[%s192 + $0x18] sm:$0xff]
        %v995 = vld [vmem:[%s192 + $0x20] sm:$0xff]
        %v996 = vld [vmem:[%s192 + $0x28] sm:$0xff]
        %v997 = vld [vmem:[%s192 + $0x30] sm:$0xff]
        %v998 = vld [vmem:[%s192 + $0x38] sm:$0xff]
        %v999 = vld [vmem:[%s192 + $0x40] sm:$0xff]
        %v1000 = vld [vmem:[%s192 + $0x48] sm:$0xff]
        %v1001 = vld [vmem:[%s192 + $0x50] sm:$0xff]
        %v1002 = vld [vmem:[%s192 + $0x58] sm:$0xff]
        %v1003 = vld [vmem:[%s192 + $0x60] sm:$0xff]
        %v1004 = vld [vmem:[%s192 + $0x68] sm:$0xff]
        %v1005 = vld [vmem:[%s192 + $0x70] sm:$0xff]
        %v1006 = vld [vmem:[%s192 + $0x78] sm:$0xff]
        %v1007 = vld [vmem:[%s192 + $0x80] sm:$0xff]
        %v1008 = vld [vmem:[%s192 + $0x88] sm:$0xff]
        %v1009 = vld [vmem:[%s192 + $0x90] sm:$0xff]
        %v1010 = vld [vmem:[%s192 + $0x98] sm:$0xff]
        %v1011 = vld [vmem:[%s192 + $0xa0] sm:$0xff]
        %v1012 = vld [vmem:[%s192 + $0xa8] sm:$0xff]
        %v1013 = vld [vmem:[%s192 + $0xb0] sm:$0xff]
        %v1014 = vld [vmem:[%s192 + $0xb8] sm:$0xff]
        %v1015 = vld [vmem:[%s192 + $0xc0] sm:$0xff]
        %v1016 = vld [vmem:[%s192 + $0xc8] sm:$0xff]
        %v1017 = vld [vmem:[%s192 + $0xd0] sm:$0xff]
        %v1018 = vld [vmem:[%s192 + $0xd8] sm:$0xff]
        %v1019 = vld [vmem:[%s192 + $0xe0] sm:$0xff]
        %v1020 = vld [vmem:[%s192 + $0xe8] sm:$0xff]
        %v1021 = vld [vmem:[%s192 + $0xf0] sm:$0xff]
        %v1022 = vld [vmem:[%s192 + $0xf8] sm:$0xff]
        %1024 = vset.pattern.permute.xlu0 0
        %1025 = vperm.xlu0 %1024, %v960
        %v1026 = vpop.permute.xlu0 %1025
        %1029 = vset.pattern.permute.xlu0 0
        %1030 = vperm.xlu0 %1029, %v962
        %v1031 = vpop.permute.xlu0 %1030
        %1034 = vset.pattern.permute.xlu0 0
        %1035 = vperm.xlu0 %1034, %v964
        %v1036 = vpop.permute.xlu0 %1035
        %1039 = vset.pattern.permute.xlu0 0
        %1040 = vperm.xlu0 %1039, %v966
        %v1041 = vpop.permute.xlu0 %1040
        %1044 = vset.pattern.permute.xlu0 0
        %1045 = vperm.xlu0 %1044, %v968
        %v1046 = vpop.permute.xlu0 %1045
        %1049 = vset.pattern.permute.xlu0 0
        %1050 = vperm.xlu0 %1049, %v970
        %v1051 = vpop.permute.xlu0 %1050
        %1054 = vset.pattern.permute.xlu0 0
        %1055 = vperm.xlu0 %1054, %v972
        %v1056 = vpop.permute.xlu0 %1055
        %1059 = vset.pattern.permute.xlu0 0
        %1060 = vperm.xlu0 %1059, %v974
        %v1061 = vpop.permute.xlu0 %1060
        %1064 = vset.pattern.permute.xlu0 0
        %1065 = vperm.xlu0 %1064, %v976
        %v1066 = vpop.permute.xlu0 %1065
        %1069 = vset.pattern.permute.xlu0 0
        %1070 = vperm.xlu0 %1069, %v978
        %v1071 = vpop.permute.xlu0 %1070
        %1074 = vset.pattern.permute.xlu0 0
        %1075 = vperm.xlu0 %1074, %v980
        %v1076 = vpop.permute.xlu0 %1075
        %1079 = vset.pattern.permute.xlu0 0
        %1080 = vperm.xlu0 %1079, %v982
        %v1081 = vpop.permute.xlu0 %1080
        %1084 = vset.pattern.permute.xlu0 0
        %1085 = vperm.xlu0 %1084, %v984
        %v1086 = vpop.permute.xlu0 %1085
        %1089 = vset.pattern.permute.xlu0 0
        %1090 = vperm.xlu0 %1089, %v986
        %v1091 = vpop.permute.xlu0 %1090
        %1094 = vset.pattern.permute.xlu0 0
        %1095 = vperm.xlu0 %1094, %v988
        %v1096 = vpop.permute.xlu0 %1095
        %1099 = vset.pattern.permute.xlu0 0
        %1100 = vperm.xlu0 %1099, %v990
        %v1101 = vpop.permute.xlu0 %1100
        %v1103 = vmul.f32 %v991, %v1026
        %v1104 = vmul.f32 %v992, %v1026
        %v1105 = vmul.f32 %v993, %v1031
        %v1106 = vmul.f32 %v994, %v1031
        %v1107 = vmul.f32 %v995, %v1036
        %v1108 = vmul.f32 %v996, %v1036
        %v1109 = vmul.f32 %v997, %v1041
        %v1110 = vmul.f32 %v998, %v1041
        %v1111 = vmul.f32 %v999, %v1046
        %v1112 = vmul.f32 %v1000, %v1046
        %v1113 = vmul.f32 %v1001, %v1051
        %v1114 = vmul.f32 %v1002, %v1051
        %v1115 = vmul.f32 %v1003, %v1056
        %v1116 = vmul.f32 %v1004, %v1056
        %v1117 = vmul.f32 %v1005, %v1061
        %v1118 = vmul.f32 %v1006, %v1061
        %v1119 = vmul.f32 %v1007, %v1066
        %v1120 = vmul.f32 %v1008, %v1066
        %v1121 = vmul.f32 %v1009, %v1071
        %v1122 = vmul.f32 %v1010, %v1071
        %v1123 = vmul.f32 %v1011, %v1076
        %v1124 = vmul.f32 %v1012, %v1076
        %v1125 = vmul.f32 %v1013, %v1081
        %v1126 = vmul.f32 %v1014, %v1081
        %v1127 = vmul.f32 %v1015, %v1086
        %v1128 = vmul.f32 %v1016, %v1086
        %v1129 = vmul.f32 %v1017, %v1091
        %v1130 = vmul.f32 %v1018, %v1091
        %v1131 = vmul.f32 %v1019, %v1096
        %v1132 = vmul.f32 %v1020, %v1096
        %v1133 = vmul.f32 %v1021, %v1101
        %v1134 = vmul.f32 %v1022, %v1101
        %1135 = vst [vmem:[%s216] sm:$0xff] %v1103
        %1136 = vst [vmem:[%s216 + $0x8] sm:$0xff] %v1104
        %1137 = vst [vmem:[%s216 + $0x10] sm:$0xff] %v1105
        %1138 = vst [vmem:[%s216 + $0x18] sm:$0xff] %v1106
        %1139 = vst [vmem:[%s216 + $0x20] sm:$0xff] %v1107
        %1140 = vst [vmem:[%s216 + $0x28] sm:$0xff] %v1108
        %1141 = vst [vmem:[%s216 + $0x30] sm:$0xff] %v1109
        %1142 = vst [vmem:[%s216 + $0x38] sm:$0xff] %v1110
        %1143 = vst [vmem:[%s216 + $0x40] sm:$0xff] %v1111
        %1144 = vst [vmem:[%s216 + $0x48] sm:$0xff] %v1112
        %1145 = vst [vmem:[%s216 + $0x50] sm:$0xff] %v1113
        %1146 = vst [vmem:[%s216 + $0x58] sm:$0xff] %v1114
        %1147 = vst [vmem:[%s216 + $0x60] sm:$0xff] %v1115
        %1148 = vst [vmem:[%s216 + $0x68] sm:$0xff] %v1116
        %1149 = vst [vmem:[%s216 + $0x70] sm:$0xff] %v1117
        %1150 = vst [vmem:[%s216 + $0x78] sm:$0xff] %v1118
        %1151 = vst [vmem:[%s216 + $0x80] sm:$0xff] %v1119
        %1152 = vst [vmem:[%s216 + $0x88] sm:$0xff] %v1120
        %1153 = vst [vmem:[%s216 + $0x90] sm:$0xff] %v1121
        %1154 = vst [vmem:[%s216 + $0x98] sm:$0xff] %v1122
        %1155 = vst [vmem:[%s216 + $0xa0] sm:$0xff] %v1123
        %1156 = vst [vmem:[%s216 + $0xa8] sm:$0xff] %v1124
        %1157 = vst [vmem:[%s216 + $0xb0] sm:$0xff] %v1125
        %1158 = vst [vmem:[%s216 + $0xb8] sm:$0xff] %v1126
        %1159 = vst [vmem:[%s216 + $0xc0] sm:$0xff] %v1127
        %1160 = vst [vmem:[%s216 + $0xc8] sm:$0xff] %v1128
        %1161 = vst [vmem:[%s216 + $0xd0] sm:$0xff] %v1129
        %1162 = vst [vmem:[%s216 + $0xd8] sm:$0xff] %v1130
        %1163 = vst [vmem:[%s216 + $0xe0] sm:$0xff] %v1131
        %1164 = vst [vmem:[%s216 + $0xe8] sm:$0xff] %v1132
        %1165 = vst [vmem:[%s216 + $0xf0] sm:$0xff] %v1133
        %1166 = vst [vmem:[%s216 + $0xf8] sm:$0xff] %v1134
        %s1167 = sand.u32 %s118, 1
        %s1168 = scalar_lea.sflag [#allocation4], %s1167
        %s1169 = sand.u32 %s118, 1
        %s1170 = smul.addr %s1169, 256
        %s1171 = scalar_lea.vmem [#allocation5], %s1170
        // Predicated region
        $region41: #{tpu_custom_call.1} parent=35 // pred_check
          %p1172 = pneg %p128
        $region42: #{tpu_custom_call.1} parent=35 // pred_check_branch
          %1174 = sbr.rel (%p1172) target = $region44
        $region43: #{tpu_custom_call.1} parent=35 // pred_region
          %s1175 = smul.u32 4, %s21
          %s1177 = ssub.s32 4096, 4096
          %1178 = vsyncadd %s1168, %s1177
          %s1179 = smul.addr %s1175, 8
          %s1180 = smul.addr %s1179, 128
          %s1181 = scalar_lea.hbm %s4, %s1180
          %s1182 = sshll.u32 %s1171, 4
          %s1183 = int_to_ptr.vmem [resolvable:$true] %s1182
          %1188 = dma.vmem_to_hbm [thread:$0]  %s1183, 4096, %s1181, %s1168, 256, 256, 16
        $region44: #{tpu_custom_call.1} parent=35 // pred_fallthru
          _
      $region36: #{tpu_custom_call.1} parent=5 // pred_fallthru
        _
      %p1189 = scmp.le.s32.totalorder 2, %s16
      // Predicated region
      $region45: #{tpu_custom_call.1} parent=5 // pred_check
        %p1190 = pneg %p1189
      $region46: #{tpu_custom_call.1} parent=5 // pred_check_branch
        %1192 = sbr.rel (%p1190) target = $region48
      $region47: #{tpu_custom_call.1} parent=5 // pred_region
        %s1193 = ssub.s32 %s16, 2
        // Predicated region
        $region49: #{tpu_custom_call.1} parent=47 // pred_check
          %p1194 = pneg %p134
        $region50: #{tpu_custom_call.1} parent=47 // pred_check_branch
          %1196 = sbr.rel (%p1194) target = $region52
        $region51: #{tpu_custom_call.1} parent=47 // pred_region
          %s1197 = sand.u32 %s119, 1
          %s1198 = scalar_lea.sflag [#allocation4], %s1197
          %s1199 = sand.u32 %s119, 1
          %s1200 = smul.addr %s1199, 256
          %s1201 = scalar_lea.vmem [#allocation5], %s1200
          %1202 = dma.done %s1198, 4096
        $region52: #{tpu_custom_call.1} parent=47 // pred_fallthru
          _
      $region48: #{tpu_custom_call.1} parent=5 // pred_fallthru
        _
    $region6: #{tpu_custom_call.1} parent=1 // loop_footer
      %s20 = sadd.s32 1, %s16
    $region7: #{tpu_custom_call.1} parent=1 // loop_footer_branch
      %15 = sbr.rel target = $region3
    $region8: #{tpu_custom_call.1} parent=1 // loop_exit
      _
    %1203 = vsyncpa [#allocation3], 1
    %s1204 = scalar_lea.sflag [#allocation3], 1
    %1205 = vsyncpa %s1204, 1
    %1206 = vsyncpa [#allocation4], 1
    %s1207 = scalar_lea.sflag [#allocation4], 1
    %1208 = vsyncpa %s1207, 1

</llo_original>
